<compile_context>
chip_gen: v7x
topology: tpu7x:2x2x1
jax: 0.10.0
libtpu: 0.0.40
codegen_flags: <defaults>
</compile_context>

<pallas_src>
import functools

import jax
import jax.numpy as jnp
from jax.experimental import pallas as pl
from jax.experimental.pallas import tpu as pltpu

TAPS = 11  # Conv1d kernel_size in conv_left / conv_right


def _prelu(v, a):
    return jnp.where(v >= 0.0, v, a * v)


def glu_block_kernel(alphas_ref, x_ref, w_in_ref, w_l_ref, w_r_ref, w_out_ref,
                     b_in_ref, b_l_ref, b_r_ref, b_out_ref, o_ref,
                     *, dilation, c_half):
    a_l = alphas_ref[0]
    a_r = alphas_ref[1]
    a_o = alphas_ref[2]

    n_batch = x_ref.shape[0]      # static: 1 (batch grid) or B (merged)
    seq = x_ref.shape[2]

    # Lane-position iota, built once per grid step (single vreg).
    lane = jax.lax.broadcasted_iota(jnp.int32, (c_half, seq), 1)

    def causal_im2col(v):
        # v: (Ch, T).  Row block k holds v shifted right by (TAPS-1-k)*dilation
        # lanes with zero fill (causal left padding).  Shift = XLU lane rotate,
        # zero fill = one select per tap against the precomputed lane iota.
        taps = []
        for k in range(TAPS):
            s = (TAPS - 1 - k) * dilation
            if s == 0:
                taps.append(v)
            else:
                rolled = pltpu.roll(v, shift=s, axis=1)
                taps.append(jnp.where(lane >= s, rolled, 0.0))
        return jnp.concatenate(taps, axis=0)                  # (TAPS*Ch, T)

    for b in range(n_batch):                                  # static unroll
        x = x_ref[b]                                          # (C, T)

        # ---- in_conv: 1x1 conv with BN folded (bias pre-broadcast) ----
        h = jnp.dot(w_in_ref[...], x,
                    preferred_element_type=jnp.float32) + b_in_ref[...]

        # ---- PReLU on single-vreg h per branch, then roll+mask taps ----
        hl = causal_im2col(_prelu(h, a_l))
        hr = causal_im2col(_prelu(h, a_r))

        # ---- dilated causal convs as single K = TAPS*Ch contractions ----
        xl = jnp.dot(w_l_ref[...], hl,
                     preferred_element_type=jnp.float32) + b_l_ref[...]
        xr = jnp.dot(w_r_ref[...], hr,
                     preferred_element_type=jnp.float32) + b_r_ref[...]

        # ---- GLU gate ----
        g = xl * jax.nn.sigmoid(xr)

        # ---- out_conv: 1x1 conv (BN folded), residual, PReLU ----
        out = jnp.dot(w_out_ref[...], g,
                      preferred_element_type=jnp.float32) + b_out_ref[...]
        o_ref[b] = _prelu(out + x, a_o)


def _tensorcores_per_device():
    """Best-effort TensorCores-per-JAX-device (picks batch-grid vs merged)."""
    try:
        kind = jax.devices()[0].device_kind.lower()
    except Exception:
        return 1
    for tag in ("v5 lite", "v5lite", "v5e", "v6 lite", "v6lite", "v6e"):
        if tag in kind:
            return 1          # single TensorCore: do whole batch in one step
    return 2                  # v7x / megacore: keep parallel batch grid axis


def glu_block_forward(x_ncl, params, dilation, *, batch_per_block=None):
    """x_ncl: (B, C, T) float32 (PyTorch NCL layout). Returns (B, C, T)."""
    x = x_ncl.astype(jnp.float32)                  # channels-first, no transpose
    B, C, T = x.shape
    Ch = C // 2
    assert C % 2 == 0
    assert (TAPS - 1) * dilation < T, "causal window must fit in one T block"

    if batch_per_block is None:
        batch_per_block = 1 if (_tensorcores_per_device() > 1 and B > 1) else B
    assert B % batch_per_block == 0
    num_blocks = B // batch_per_block
    Bb = batch_per_block

    # ---- fold BN scale into conv weights; merge bias + BN shift; pre-broadcast ----
    sc_in, sh_in = params["sc_in"], params["sh_in"]
    sc_l, sh_l = params["sc_l"], params["sh_l"]
    sc_r, sh_r = params["sc_r"], params["sh_r"]
    sc_out, sh_out = params["sc_out"], params["sh_out"]

    w_in = params["w_in"][:, :, 0] * sc_in[:, None]                    # (Ch, C)
    b_in = jnp.broadcast_to((params["b_in"] * sc_in + sh_in)[:, None], (Ch, T))

    def flat_dilated(w, sc):
        # (Cout, Cin, K) -> (Cout, K*Cin); column index = k*Ch + ci; BN folded.
        return jnp.transpose(w, (0, 2, 1)).reshape(Ch, TAPS * Ch) * sc[:, None]

    w_l = flat_dilated(params["w_l"], sc_l)                            # (Ch, 11Ch)
    w_r = flat_dilated(params["w_r"], sc_r)
    b_l = jnp.broadcast_to((params["b_l"] * sc_l + sh_l)[:, None], (Ch, T))
    b_r = jnp.broadcast_to((params["b_r"] * sc_r + sh_r)[:, None], (Ch, T))

    w_out = params["w_out"][:, :, 0] * sc_out[:, None]                 # (C, Ch)
    b_out = jnp.broadcast_to((params["b_out"] * sc_out + sh_out)[:, None], (C, T))

    alphas = jnp.array([params["alpha_l"], params["alpha_r"], params["alpha_o"]],
                       dtype=jnp.float32)

    kernel = functools.partial(glu_block_kernel, dilation=dilation, c_half=Ch)
    full = lambda i: (0, 0)

    flops = 2 * B * T * (Ch * C + 2 * TAPS * Ch * Ch + C * Ch)
    bytes_accessed = 4 * (2 * B * C * T + Ch * C + 2 * TAPS * Ch * Ch + C * Ch
                          + 2 * Ch * T + 2 * C * T + 3)
    cost = pl.CostEstimate(flops=flops, transcendentals=B * Ch * T,
                           bytes_accessed=bytes_accessed)

    out = pl.pallas_call(
        kernel,
        out_shape=jax.ShapeDtypeStruct((B, C, T), jnp.float32),
        grid=(num_blocks,),
        in_specs=[
            pl.BlockSpec(memory_space=pltpu.MemorySpace.SMEM),        # alphas (3,)
            pl.BlockSpec((Bb, C, T), lambda i: (i, 0, 0)),            # x
            pl.BlockSpec((Ch, C), full),                              # w_in
            pl.BlockSpec((Ch, TAPS * Ch), full),                      # w_l
            pl.BlockSpec((Ch, TAPS * Ch), full),                      # w_r
            pl.BlockSpec((C, Ch), full),                              # w_out
            pl.BlockSpec((Ch, T), full),                              # b_in
            pl.BlockSpec((Ch, T), full),                              # b_l
            pl.BlockSpec((Ch, T), full),                              # b_r
            pl.BlockSpec((C, T), full),                               # b_out
        ],
        out_specs=pl.BlockSpec((Bb, C, T), lambda i: (i, 0, 0)),
        compiler_params=pltpu.CompilerParams(
            dimension_semantics=("parallel",)),
        cost_estimate=cost,
    )(alphas, x, w_in, w_l, w_r, w_out, b_in, b_l, b_r, b_out)
    return out


# ---------------- pure-JAX reference (independent of the kernel) ----------------
def _conv1d_torch(x_ncl, w_oik, b, dilation=1):
    out = jax.lax.conv_general_dilated(
        x_ncl, w_oik, window_strides=(1,), padding=[(0, 0)],
        rhs_dilation=(dilation,), dimension_numbers=("NCH", "OIH", "NCH"))
    return out + b[None, :, None]


def glu_block_reference(x, p, dilation):
    def bn(v, scale, shift):
        return v * scale[None, :, None] + shift[None, :, None]

    h = bn(_conv1d_torch(x, p["w_in"], p["b_in"]), p["sc_in"], p["sh_in"])
    pad = dilation * (TAPS - 1)
    hl = jnp.pad(_prelu(h, p["alpha_l"]), ((0, 0), (0, 0), (pad, 0)))
    xl = bn(_conv1d_torch(hl, p["w_l"], p["b_l"], dilation), p["sc_l"], p["sh_l"])
    hr = jnp.pad(_prelu(h, p["alpha_r"]), ((0, 0), (0, 0), (pad, 0)))
    xr = bn(_conv1d_torch(hr, p["w_r"], p["b_r"], dilation), p["sc_r"], p["sh_r"])
    g = xl * jax.nn.sigmoid(xr)
    o = bn(_conv1d_torch(g, p["w_out"], p["b_out"]), p["sc_out"], p["sh_out"])
    return _prelu(o + x, p["alpha_o"])


# ---------------- deterministic parameter init ----------------
def init_params(key, n_channels):
    C = n_channels
    Ch = C // 2
    ks = list(jax.random.split(key, 24))

    def w(k, shape, scale=0.2):
        return scale * jax.random.normal(k, shape, jnp.float32)

    def bn_fold(kg, kb, km, kv, ch):
        gamma = 1.0 + 0.1 * jax.random.normal(kg, (ch,), jnp.float32)
        beta = 0.1 * jax.random.normal(kb, (ch,), jnp.float32)
        mean = 0.1 * jax.random.normal(km, (ch,), jnp.float32)
        var = 1.0 + 0.5 * jax.random.uniform(kv, (ch,), jnp.float32)
        scale = gamma * jax.lax.rsqrt(var + 1e-5)
        shift = beta - mean * scale
        return scale, shift

    p = {}
    p["w_in"] = w(ks[0], (Ch, C, 1));      p["b_in"] = w(ks[1], (Ch,), 0.1)
    p["sc_in"], p["sh_in"] = bn_fold(ks[2], ks[3], ks[4], ks[5], Ch)
    p["w_l"] = w(ks[6], (Ch, Ch, TAPS));   p["b_l"] = w(ks[7], (Ch,), 0.1)
    p["sc_l"], p["sh_l"] = bn_fold(ks[8], ks[9], ks[10], ks[11], Ch)
    p["w_r"] = w(ks[12], (Ch, Ch, TAPS));  p["b_r"] = w(ks[13], (Ch,), 0.1)
    p["sc_r"], p["sh_r"] = bn_fold(ks[14], ks[15], ks[16], ks[17], Ch)
    p["w_out"] = w(ks[18], (C, Ch, 1));    p["b_out"] = w(ks[19], (C,), 0.1)
    p["sc_out"], p["sh_out"] = bn_fold(ks[20], ks[21], ks[22], ks[23], C)
    # PReLU slopes (PyTorch default is 0.25; distinct values to catch mixups)
    p["alpha_l"] = jnp.float32(0.25)
    p["alpha_r"] = jnp.float32(0.20)
    p["alpha_o"] = jnp.float32(0.30)
    return p


if __name__ == "__main__":
    B, C, T = 2, 16, 128          # batch, n_channels, sequence length
    dilation_rate = 2

    key = jax.random.PRNGKey(0)
    kx, kp = jax.random.split(key)
    x = jax.random.normal(kx, (B, C, T), jnp.float32)   # PyTorch NCL input
    params = init_params(kp, C)

    out = glu_block_forward(x, params, dilation_rate)
    out = jax.block_until_ready(out)

    ref = glu_block_reference(x, params, dilation_rate)
    assert out.shape == (B, C, T)
    err = jnp.max(jnp.abs(out - ref))
    assert jnp.allclose(out, ref, rtol=1e-3, atol=1e-3), f"max abs diff = {err}"

    print("KERNEL_OK")
</pallas_src>

<mosaic_0001>
module attributes {stable_mosaic.version = 11 : i64} {
  func.func @glu_block_kernel(%arg0: i32, %arg1: memref<3xf32, #tpu.memory_space<smem>>, %arg2: memref<1x16x128xf32, #tpu.memory_space<vmem>>, %arg3: memref<8x16xf32, #tpu.memory_space<vmem>>, %arg4: memref<8x88xf32, #tpu.memory_space<vmem>>, %arg5: memref<8x88xf32, #tpu.memory_space<vmem>>, %arg6: memref<16x8xf32, #tpu.memory_space<vmem>>, %arg7: memref<8x128xf32, #tpu.memory_space<vmem>>, %arg8: memref<8x128xf32, #tpu.memory_space<vmem>>, %arg9: memref<8x128xf32, #tpu.memory_space<vmem>>, %arg10: memref<16x128xf32, #tpu.memory_space<vmem>>, %arg11: memref<1x16x128xf32, #tpu.memory_space<vmem>>) attributes {dimension_semantics = [#tpu.dimension_semantics<parallel>], iteration_bounds = array<i64: 2>, scalar_prefetch = 0 : i64, scratch_operands = 0 : i64, tpu.core_type = #tpu.core_type<tc>, window_params = [{transform_indices = @transform_0, window_bounds = array<i64: 3>}, {transform_indices = @transform_1, window_bounds = array<i64: 1, 16, 128>}, {pipeline_mode = #tpu.pipeline_mode<synchronous>, transform_indices = @transform_2, window_bounds = array<i64: 8, 16>}, {pipeline_mode = #tpu.pipeline_mode<synchronous>, transform_indices = @transform_3, window_bounds = array<i64: 8, 88>}, {pipeline_mode = #tpu.pipeline_mode<synchronous>, transform_indices = @transform_4, window_bounds = array<i64: 8, 88>}, {pipeline_mode = #tpu.pipeline_mode<synchronous>, transform_indices = @transform_5, window_bounds = array<i64: 16, 8>}, {pipeline_mode = #tpu.pipeline_mode<synchronous>, transform_indices = @transform_6, window_bounds = array<i64: 8, 128>}, {pipeline_mode = #tpu.pipeline_mode<synchronous>, transform_indices = @transform_7, window_bounds = array<i64: 8, 128>}, {pipeline_mode = #tpu.pipeline_mode<synchronous>, transform_indices = @transform_8, window_bounds = array<i64: 8, 128>}, {pipeline_mode = #tpu.pipeline_mode<synchronous>, transform_indices = @transform_9, window_bounds = array<i64: 16, 128>}, {transform_indices = @transform_10, window_bounds = array<i64: 1, 16, 128>}]} {
    %c0 = arith.constant 0 : index
    %0 = memref.load %arg1[%c0] : memref<3xf32, #tpu.memory_space<smem>>
    %c1 = arith.constant 1 : index
    %1 = memref.load %arg1[%c1] : memref<3xf32, #tpu.memory_space<smem>>
    %c2 = arith.constant 2 : index
    %2 = memref.load %arg1[%c2] : memref<3xf32, #tpu.memory_space<smem>>
    %3 = tpu.iota {dimensions = array<i32: 1>} : vector<8x128xi32>
    %c0_0 = arith.constant 0 : index
    %c0_1 = arith.constant 0 : index
    %c0_2 = arith.constant 0 : index
    %4 = vector.load %arg2[%c0_0, %c0_1, %c0_2] : memref<1x16x128xf32, #tpu.memory_space<vmem>>, vector<1x16x128xf32>
    %5 = vector.shape_cast %4 : vector<1x16x128xf32> to vector<16x128xf32>
    %c0_3 = arith.constant 0 : index
    %c0_4 = arith.constant 0 : index
    %6 = vector.load %arg3[%c0_3, %c0_4] : memref<8x16xf32, #tpu.memory_space<vmem>>, vector<8x16xf32>
    %cst = arith.constant dense<0.000000e+00> : vector<8x128xf32>
    %7 = tpu.matmul %6, %5, %cst {dimension_numbers = #tpu.dot_dimension_numbers<[1], [0], [0], [1], [0, 0, 1, 1], [], []>} : vector<8x16xf32>, vector<16x128xf32>, vector<8x128xf32> -> vector<8x128xf32>
    %c0_5 = arith.constant 0 : index
    %c0_6 = arith.constant 0 : index
    %8 = vector.load %arg7[%c0_5, %c0_6] : memref<8x128xf32, #tpu.memory_space<vmem>>, vector<8x128xf32>
    %9 = arith.addf %7, %8 : vector<8x128xf32>
    %cst_7 = arith.constant 0.000000e+00 : f32
    %10 = vector.broadcast %cst_7 : f32 to vector<8x128xf32>
    %11 = arith.cmpf oge, %9, %10 : vector<8x128xf32>
    %12 = vector.broadcast %0 : f32 to vector<8x128xf32>
    %13 = arith.mulf %12, %9 : vector<8x128xf32>
    %14 = arith.select %11, %9, %13 : vector<8x128xi1>, vector<8x128xf32>
    %c20_i32 = arith.constant 20 : i32
    %15 = tpu.dynamic_rotate %14 by %c20_i32 dim 1 : vector<8x128xf32>, i32 -> vector<8x128xf32>
    %c20_i32_8 = arith.constant 20 : i32
    %16 = vector.broadcast %c20_i32_8 : i32 to vector<8x128xi32>
    %17 = arith.cmpi sge, %3, %16 : vector<8x128xi32>
    %cst_9 = arith.constant 0.000000e+00 : f32
    %18 = vector.broadcast %cst_9 : f32 to vector<8x128xf32>
    %19 = arith.select %17, %15, %18 : vector<8x128xi1>, vector<8x128xf32>
    %c18_i32 = arith.constant 18 : i32
    %20 = tpu.dynamic_rotate %14 by %c18_i32 dim 1 : vector<8x128xf32>, i32 -> vector<8x128xf32>
    %c18_i32_10 = arith.constant 18 : i32
    %21 = vector.broadcast %c18_i32_10 : i32 to vector<8x128xi32>
    %22 = arith.cmpi sge, %3, %21 : vector<8x128xi32>
    %cst_11 = arith.constant 0.000000e+00 : f32
    %23 = vector.broadcast %cst_11 : f32 to vector<8x128xf32>
    %24 = arith.select %22, %20, %23 : vector<8x128xi1>, vector<8x128xf32>
    %c16_i32 = arith.constant 16 : i32
    %25 = tpu.dynamic_rotate %14 by %c16_i32 dim 1 : vector<8x128xf32>, i32 -> vector<8x128xf32>
    %c16_i32_12 = arith.constant 16 : i32
    %26 = vector.broadcast %c16_i32_12 : i32 to vector<8x128xi32>
    %27 = arith.cmpi sge, %3, %26 : vector<8x128xi32>
    %cst_13 = arith.constant 0.000000e+00 : f32
    %28 = vector.broadcast %cst_13 : f32 to vector<8x128xf32>
    %29 = arith.select %27, %25, %28 : vector<8x128xi1>, vector<8x128xf32>
    %c14_i32 = arith.constant 14 : i32
    %30 = tpu.dynamic_rotate %14 by %c14_i32 dim 1 : vector<8x128xf32>, i32 -> vector<8x128xf32>
    %c14_i32_14 = arith.constant 14 : i32
    %31 = vector.broadcast %c14_i32_14 : i32 to vector<8x128xi32>
    %32 = arith.cmpi sge, %3, %31 : vector<8x128xi32>
    %cst_15 = arith.constant 0.000000e+00 : f32
    %33 = vector.broadcast %cst_15 : f32 to vector<8x128xf32>
    %34 = arith.select %32, %30, %33 : vector<8x128xi1>, vector<8x128xf32>
    %c12_i32 = arith.constant 12 : i32
    %35 = tpu.dynamic_rotate %14 by %c12_i32 dim 1 : vector<8x128xf32>, i32 -> vector<8x128xf32>
    %c12_i32_16 = arith.constant 12 : i32
    %36 = vector.broadcast %c12_i32_16 : i32 to vector<8x128xi32>
    %37 = arith.cmpi sge, %3, %36 : vector<8x128xi32>
    %cst_17 = arith.constant 0.000000e+00 : f32
    %38 = vector.broadcast %cst_17 : f32 to vector<8x128xf32>
    %39 = arith.select %37, %35, %38 : vector<8x128xi1>, vector<8x128xf32>
    %c10_i32 = arith.constant 10 : i32
    %40 = tpu.dynamic_rotate %14 by %c10_i32 dim 1 : vector<8x128xf32>, i32 -> vector<8x128xf32>
    %c10_i32_18 = arith.constant 10 : i32
    %41 = vector.broadcast %c10_i32_18 : i32 to vector<8x128xi32>
    %42 = arith.cmpi sge, %3, %41 : vector<8x128xi32>
    %cst_19 = arith.constant 0.000000e+00 : f32
    %43 = vector.broadcast %cst_19 : f32 to vector<8x128xf32>
    %44 = arith.select %42, %40, %43 : vector<8x128xi1>, vector<8x128xf32>
    %c8_i32 = arith.constant 8 : i32
    %45 = tpu.dynamic_rotate %14 by %c8_i32 dim 1 : vector<8x128xf32>, i32 -> vector<8x128xf32>
    %c8_i32_20 = arith.constant 8 : i32
    %46 = vector.broadcast %c8_i32_20 : i32 to vector<8x128xi32>
    %47 = arith.cmpi sge, %3, %46 : vector<8x128xi32>
    %cst_21 = arith.constant 0.000000e+00 : f32
    %48 = vector.broadcast %cst_21 : f32 to vector<8x128xf32>
    %49 = arith.select %47, %45, %48 : vector<8x128xi1>, vector<8x128xf32>
    %c6_i32 = arith.constant 6 : i32
    %50 = tpu.dynamic_rotate %14 by %c6_i32 dim 1 : vector<8x128xf32>, i32 -> vector<8x128xf32>
    %c6_i32_22 = arith.constant 6 : i32
    %51 = vector.broadcast %c6_i32_22 : i32 to vector<8x128xi32>
    %52 = arith.cmpi sge, %3, %51 : vector<8x128xi32>
    %cst_23 = arith.constant 0.000000e+00 : f32
    %53 = vector.broadcast %cst_23 : f32 to vector<8x128xf32>
    %54 = arith.select %52, %50, %53 : vector<8x128xi1>, vector<8x128xf32>
    %c4_i32 = arith.constant 4 : i32
    %55 = tpu.dynamic_rotate %14 by %c4_i32 dim 1 : vector<8x128xf32>, i32 -> vector<8x128xf32>
    %c4_i32_24 = arith.constant 4 : i32
    %56 = vector.broadcast %c4_i32_24 : i32 to vector<8x128xi32>
    %57 = arith.cmpi sge, %3, %56 : vector<8x128xi32>
    %cst_25 = arith.constant 0.000000e+00 : f32
    %58 = vector.broadcast %cst_25 : f32 to vector<8x128xf32>
    %59 = arith.select %57, %55, %58 : vector<8x128xi1>, vector<8x128xf32>
    %c2_i32 = arith.constant 2 : i32
    %60 = tpu.dynamic_rotate %14 by %c2_i32 dim 1 : vector<8x128xf32>, i32 -> vector<8x128xf32>
    %c2_i32_26 = arith.constant 2 : i32
    %61 = vector.broadcast %c2_i32_26 : i32 to vector<8x128xi32>
    %62 = arith.cmpi sge, %3, %61 : vector<8x128xi32>
    %cst_27 = arith.constant 0.000000e+00 : f32
    %63 = vector.broadcast %cst_27 : f32 to vector<8x128xf32>
    %64 = arith.select %62, %60, %63 : vector<8x128xi1>, vector<8x128xf32>
    %65 = tpu.concatenate %19, %24, %29, %34, %39, %44, %49, %54, %59, %64, %14 in 0 : vector<8x128xf32>, vector<8x128xf32>, vector<8x128xf32>, vector<8x128xf32>, vector<8x128xf32>, vector<8x128xf32>, vector<8x128xf32>, vector<8x128xf32>, vector<8x128xf32>, vector<8x128xf32>, vector<8x128xf32> -> vector<88x128xf32>
    %cst_28 = arith.constant 0.000000e+00 : f32
    %66 = vector.broadcast %cst_28 : f32 to vector<8x128xf32>
    %67 = arith.cmpf oge, %9, %66 : vector<8x128xf32>
    %68 = vector.broadcast %1 : f32 to vector<8x128xf32>
    %69 = arith.mulf %68, %9 : vector<8x128xf32>
    %70 = arith.select %67, %9, %69 : vector<8x128xi1>, vector<8x128xf32>
    %c20_i32_29 = arith.constant 20 : i32
    %71 = tpu.dynamic_rotate %70 by %c20_i32_29 dim 1 : vector<8x128xf32>, i32 -> vector<8x128xf32>
    %c20_i32_30 = arith.constant 20 : i32
    %72 = vector.broadcast %c20_i32_30 : i32 to vector<8x128xi32>
    %73 = arith.cmpi sge, %3, %72 : vector<8x128xi32>
    %cst_31 = arith.constant 0.000000e+00 : f32
    %74 = vector.broadcast %cst_31 : f32 to vector<8x128xf32>
    %75 = arith.select %73, %71, %74 : vector<8x128xi1>, vector<8x128xf32>
    %c18_i32_32 = arith.constant 18 : i32
    %76 = tpu.dynamic_rotate %70 by %c18_i32_32 dim 1 : vector<8x128xf32>, i32 -> vector<8x128xf32>
    %c18_i32_33 = arith.constant 18 : i32
    %77 = vector.broadcast %c18_i32_33 : i32 to vector<8x128xi32>
    %78 = arith.cmpi sge, %3, %77 : vector<8x128xi32>
    %cst_34 = arith.constant 0.000000e+00 : f32
    %79 = vector.broadcast %cst_34 : f32 to vector<8x128xf32>
    %80 = arith.select %78, %76, %79 : vector<8x128xi1>, vector<8x128xf32>
    %c16_i32_35 = arith.constant 16 : i32
    %81 = tpu.dynamic_rotate %70 by %c16_i32_35 dim 1 : vector<8x128xf32>, i32 -> vector<8x128xf32>
    %c16_i32_36 = arith.constant 16 : i32
    %82 = vector.broadcast %c16_i32_36 : i32 to vector<8x128xi32>
    %83 = arith.cmpi sge, %3, %82 : vector<8x128xi32>
    %cst_37 = arith.constant 0.000000e+00 : f32
    %84 = vector.broadcast %cst_37 : f32 to vector<8x128xf32>
    %85 = arith.select %83, %81, %84 : vector<8x128xi1>, vector<8x128xf32>
    %c14_i32_38 = arith.constant 14 : i32
    %86 = tpu.dynamic_rotate %70 by %c14_i32_38 dim 1 : vector<8x128xf32>, i32 -> vector<8x128xf32>
    %c14_i32_39 = arith.constant 14 : i32
    %87 = vector.broadcast %c14_i32_39 : i32 to vector<8x128xi32>
    %88 = arith.cmpi sge, %3, %87 : vector<8x128xi32>
    %cst_40 = arith.constant 0.000000e+00 : f32
    %89 = vector.broadcast %cst_40 : f32 to vector<8x128xf32>
    %90 = arith.select %88, %86, %89 : vector<8x128xi1>, vector<8x128xf32>
    %c12_i32_41 = arith.constant 12 : i32
    %91 = tpu.dynamic_rotate %70 by %c12_i32_41 dim 1 : vector<8x128xf32>, i32 -> vector<8x128xf32>
    %c12_i32_42 = arith.constant 12 : i32
    %92 = vector.broadcast %c12_i32_42 : i32 to vector<8x128xi32>
    %93 = arith.cmpi sge, %3, %92 : vector<8x128xi32>
    %cst_43 = arith.constant 0.000000e+00 : f32
    %94 = vector.broadcast %cst_43 : f32 to vector<8x128xf32>
    %95 = arith.select %93, %91, %94 : vector<8x128xi1>, vector<8x128xf32>
    %c10_i32_44 = arith.constant 10 : i32
    %96 = tpu.dynamic_rotate %70 by %c10_i32_44 dim 1 : vector<8x128xf32>, i32 -> vector<8x128xf32>
    %c10_i32_45 = arith.constant 10 : i32
    %97 = vector.broadcast %c10_i32_45 : i32 to vector<8x128xi32>
    %98 = arith.cmpi sge, %3, %97 : vector<8x128xi32>
    %cst_46 = arith.constant 0.000000e+00 : f32
    %99 = vector.broadcast %cst_46 : f32 to vector<8x128xf32>
    %100 = arith.select %98, %96, %99 : vector<8x128xi1>, vector<8x128xf32>
    %c8_i32_47 = arith.constant 8 : i32
    %101 = tpu.dynamic_rotate %70 by %c8_i32_47 dim 1 : vector<8x128xf32>, i32 -> vector<8x128xf32>
    %c8_i32_48 = arith.constant 8 : i32
    %102 = vector.broadcast %c8_i32_48 : i32 to vector<8x128xi32>
    %103 = arith.cmpi sge, %3, %102 : vector<8x128xi32>
    %cst_49 = arith.constant 0.000000e+00 : f32
    %104 = vector.broadcast %cst_49 : f32 to vector<8x128xf32>
    %105 = arith.select %103, %101, %104 : vector<8x128xi1>, vector<8x128xf32>
    %c6_i32_50 = arith.constant 6 : i32
    %106 = tpu.dynamic_rotate %70 by %c6_i32_50 dim 1 : vector<8x128xf32>, i32 -> vector<8x128xf32>
    %c6_i32_51 = arith.constant 6 : i32
    %107 = vector.broadcast %c6_i32_51 : i32 to vector<8x128xi32>
    %108 = arith.cmpi sge, %3, %107 : vector<8x128xi32>
    %cst_52 = arith.constant 0.000000e+00 : f32
    %109 = vector.broadcast %cst_52 : f32 to vector<8x128xf32>
    %110 = arith.select %108, %106, %109 : vector<8x128xi1>, vector<8x128xf32>
    %c4_i32_53 = arith.constant 4 : i32
    %111 = tpu.dynamic_rotate %70 by %c4_i32_53 dim 1 : vector<8x128xf32>, i32 -> vector<8x128xf32>
    %c4_i32_54 = arith.constant 4 : i32
    %112 = vector.broadcast %c4_i32_54 : i32 to vector<8x128xi32>
    %113 = arith.cmpi sge, %3, %112 : vector<8x128xi32>
    %cst_55 = arith.constant 0.000000e+00 : f32
    %114 = vector.broadcast %cst_55 : f32 to vector<8x128xf32>
    %115 = arith.select %113, %111, %114 : vector<8x128xi1>, vector<8x128xf32>
    %c2_i32_56 = arith.constant 2 : i32
    %116 = tpu.dynamic_rotate %70 by %c2_i32_56 dim 1 : vector<8x128xf32>, i32 -> vector<8x128xf32>
    %c2_i32_57 = arith.constant 2 : i32
    %117 = vector.broadcast %c2_i32_57 : i32 to vector<8x128xi32>
    %118 = arith.cmpi sge, %3, %117 : vector<8x128xi32>
    %cst_58 = arith.constant 0.000000e+00 : f32
    %119 = vector.broadcast %cst_58 : f32 to vector<8x128xf32>
    %120 = arith.select %118, %116, %119 : vector<8x128xi1>, vector<8x128xf32>
    %121 = tpu.concatenate %75, %80, %85, %90, %95, %100, %105, %110, %115, %120, %70 in 0 : vector<8x128xf32>, vector<8x128xf32>, vector<8x128xf32>, vector<8x128xf32>, vector<8x128xf32>, vector<8x128xf32>, vector<8x128xf32>, vector<8x128xf32>, vector<8x128xf32>, vector<8x128xf32>, vector<8x128xf32> -> vector<88x128xf32>
    %c0_59 = arith.constant 0 : index
    %c0_60 = arith.constant 0 : index
    %122 = vector.load %arg4[%c0_59, %c0_60] : memref<8x88xf32, #tpu.memory_space<vmem>>, vector<8x88xf32>
    %cst_61 = arith.constant dense<0.000000e+00> : vector<8x128xf32>
    %123 = tpu.matmul %122, %65, %cst_61 {dimension_numbers = #tpu.dot_dimension_numbers<[1], [0], [0], [1], [0, 0, 1, 1], [], []>} : vector<8x88xf32>, vector<88x128xf32>, vector<8x128xf32> -> vector<8x128xf32>
    %c0_62 = arith.constant 0 : index
    %c0_63 = arith.constant 0 : index
    %124 = vector.load %arg8[%c0_62, %c0_63] : memref<8x128xf32, #tpu.memory_space<vmem>>, vector<8x128xf32>
    %125 = arith.addf %123, %124 : vector<8x128xf32>
    %c0_64 = arith.constant 0 : index
    %c0_65 = arith.constant 0 : index
    %126 = vector.load %arg5[%c0_64, %c0_65] : memref<8x88xf32, #tpu.memory_space<vmem>>, vector<8x88xf32>
    %cst_66 = arith.constant dense<0.000000e+00> : vector<8x128xf32>
    %127 = tpu.matmul %126, %121, %cst_66 {dimension_numbers = #tpu.dot_dimension_numbers<[1], [0], [0], [1], [0, 0, 1, 1], [], []>} : vector<8x88xf32>, vector<88x128xf32>, vector<8x128xf32> -> vector<8x128xf32>
    %c0_67 = arith.constant 0 : index
    %c0_68 = arith.constant 0 : index
    %128 = vector.load %arg9[%c0_67, %c0_68] : memref<8x128xf32, #tpu.memory_space<vmem>>, vector<8x128xf32>
    %129 = arith.addf %127, %128 : vector<8x128xf32>
    %130 = arith.negf %129 : vector<8x128xf32>
    %131 = math.exp %130 : vector<8x128xf32>
    %cst_69 = arith.constant 1.000000e+00 : f32
    %132 = vector.broadcast %cst_69 : f32 to vector<8x128xf32>
    %133 = arith.addf %132, %131 : vector<8x128xf32>
    %134 = arith.divf %132, %133 : vector<8x128xf32>
    %135 = arith.mulf %125, %134 : vector<8x128xf32>
    %c0_70 = arith.constant 0 : index
    %c0_71 = arith.constant 0 : index
    %136 = vector.load %arg6[%c0_70, %c0_71] : memref<16x8xf32, #tpu.memory_space<vmem>>, vector<16x8xf32>
    %cst_72 = arith.constant dense<0.000000e+00> : vector<16x128xf32>
    %137 = tpu.matmul %136, %135, %cst_72 {dimension_numbers = #tpu.dot_dimension_numbers<[1], [0], [0], [1], [0, 0, 1, 1], [], []>} : vector<16x8xf32>, vector<8x128xf32>, vector<16x128xf32> -> vector<16x128xf32>
    %c0_73 = arith.constant 0 : index
    %c0_74 = arith.constant 0 : index
    %138 = vector.load %arg10[%c0_73, %c0_74] : memref<16x128xf32, #tpu.memory_space<vmem>>, vector<16x128xf32>
    %139 = arith.addf %137, %138 : vector<16x128xf32>
    %140 = arith.addf %139, %5 : vector<16x128xf32>
    %cst_75 = arith.constant 0.000000e+00 : f32
    %141 = vector.broadcast %cst_75 : f32 to vector<16x128xf32>
    %142 = arith.cmpf oge, %140, %141 : vector<16x128xf32>
    %143 = vector.broadcast %2 : f32 to vector<16x128xf32>
    %144 = arith.mulf %143, %140 : vector<16x128xf32>
    %145 = arith.select %142, %140, %144 : vector<16x128xi1>, vector<16x128xf32>
    %c0_76 = arith.constant 0 : index
    %c0_77 = arith.constant 0 : index
    %c0_78 = arith.constant 0 : index
    %146 = vector.load %arg11[%c0_76, %c0_77, %c0_78] : memref<1x16x128xf32, #tpu.memory_space<vmem>>, vector<1x16x128xf32>
    %147 = vector.shape_cast %146 : vector<1x16x128xf32> to vector<16x128xf32>
    %148 = vector.shape_cast %145 : vector<16x128xf32> to vector<1x16x128xf32>
    tpu.vector_store %arg11[%c0_76, %c0_77, %c0_78], %148 {strides = array<i32>} : memref<1x16x128xf32, #tpu.memory_space<vmem>>, vector<1x16x128xf32>,
    return
  }
  func.func @transform_0(%arg0: i32) -> i32 {
    %c0_i32 = arith.constant 0 : i32
    %c0_i32_0 = arith.constant 0 : i32
    return %c0_i32 : i32
  }
  func.func @transform_1(%arg0: i32) -> (i32, i32, i32) {
    %c0_i32 = arith.constant 0 : i32
    %c0_i32_0 = arith.constant 0 : i32
    %c0_i32_1 = arith.constant 0 : i32
    return %arg0, %c0_i32, %c0_i32_0 : i32, i32, i32
  }
  func.func @transform_2(%arg0: i32) -> (i32, i32) {
    %c0_i32 = arith.constant 0 : i32
    %c0_i32_0 = arith.constant 0 : i32
    %c0_i32_1 = arith.constant 0 : i32
    return %c0_i32, %c0_i32_0 : i32, i32
  }
  func.func @transform_3(%arg0: i32) -> (i32, i32) {
    %c0_i32 = arith.constant 0 : i32
    %c0_i32_0 = arith.constant 0 : i32
    %c0_i32_1 = arith.constant 0 : i32
    return %c0_i32, %c0_i32_0 : i32, i32
  }
  func.func @transform_4(%arg0: i32) -> (i32, i32) {
    %c0_i32 = arith.constant 0 : i32
    %c0_i32_0 = arith.constant 0 : i32
    %c0_i32_1 = arith.constant 0 : i32
    return %c0_i32, %c0_i32_0 : i32, i32
  }
  func.func @transform_5(%arg0: i32) -> (i32, i32) {
    %c0_i32 = arith.constant 0 : i32
    %c0_i32_0 = arith.constant 0 : i32
    %c0_i32_1 = arith.constant 0 : i32
    return %c0_i32, %c0_i32_0 : i32, i32
  }
  func.func @transform_6(%arg0: i32) -> (i32, i32) {
    %c0_i32 = arith.constant 0 : i32
    %c0_i32_0 = arith.constant 0 : i32
    %c0_i32_1 = arith.constant 0 : i32
    return %c0_i32, %c0_i32_0 : i32, i32
  }
  func.func @transform_7(%arg0: i32) -> (i32, i32) {
    %c0_i32 = arith.constant 0 : i32
    %c0_i32_0 = arith.constant 0 : i32
    %c0_i32_1 = arith.constant 0 : i32
    return %c0_i32, %c0_i32_0 : i32, i32
  }
  func.func @transform_8(%arg0: i32) -> (i32, i32) {
    %c0_i32 = arith.constant 0 : i32
    %c0_i32_0 = arith.constant 0 : i32
    %c0_i32_1 = arith.constant 0 : i32
    return %c0_i32, %c0_i32_0 : i32, i32
  }
  func.func @transform_9(%arg0: i32) -> (i32, i32) {
    %c0_i32 = arith.constant 0 : i32
    %c0_i32_0 = arith.constant 0 : i32
    %c0_i32_1 = arith.constant 0 : i32
    return %c0_i32, %c0_i32_0 : i32, i32
  }
  func.func @transform_10(%arg0: i32) -> (i32, i32, i32) {
    %c0_i32 = arith.constant 0 : i32
    %c0_i32_0 = arith.constant 0 : i32
    %c0_i32_1 = arith.constant 0 : i32
    return %arg0, %c0_i32, %c0_i32_0 : i32, i32, i32
  }
}

</mosaic_0001>

<llo_original>
// kernel: tpu_custom_call.1
$region0: #{tpu_custom_call.1}
  #allocation0 [shape = 'u32[]', space=smem, size = 0x4, offset = 0x4, fixed_abs, tag = 'smem constant byte address 0x4 - core index']
  #allocation1 [shape = 'u32[144,128]{1,0:T(1,128)}', space=vmem, size = 0x12000, scoped, tag = 'internal scratch']
  %s0 = inlined_call_operand.vmem [shape: f32[3], index: 0, kind: input, shape index: {}]
  %s1 = inlined_call_operand.hbm [shape: f32[2,16,128], index: 1, kind: input, shape index: {}]
  %s2 = inlined_call_operand.vmem [shape: f32[8,16], index: 2, kind: input, shape index: {}]
  %s3 = inlined_call_operand.hbm [shape: f32[8,88], index: 3, kind: input, shape index: {}]
  %s4 = inlined_call_operand.hbm [shape: f32[8,88], index: 4, kind: input, shape index: {}]
  %s5 = inlined_call_operand.vmem [shape: f32[16,8], index: 5, kind: input, shape index: {}]
  %s6 = inlined_call_operand.vmem [shape: f32[8,128], index: 6, kind: input, shape index: {}]
  %s7 = inlined_call_operand.vmem [shape: f32[8,128], index: 7, kind: input, shape index: {}]
  %s8 = inlined_call_operand.hbm [shape: f32[8,128], index: 8, kind: input, shape index: {}]
  %s9 = inlined_call_operand.vmem [shape: f32[16,128], index: 9, kind: input, shape index: {}]
  %s10 = inlined_call_operand.hbm [shape: f32[2,16,128], index: 10, kind: output, shape index: {}]
  %s11 = sld [smem:[#allocation0]]
  $region93: #{tpu_custom_call.1} parent=0
    _
  %s13 = ssub.s32 1, %s11
  %s14 = scalar_select 0, %s13, %s11
  $region1: #{tpu_custom_call.1} parent=0
    #allocation2 [shape = 'u8[512]{0}', space=smem, size = 0x200, scoped, tag = 'input window, operand 0, single buffered']
    #allocation3 [shape = 's32[2]{0}', space=sflag, size = 0x8, scoped, tag = 'scoped memory for tpu_custom_call.1']
    #allocation4 [shape = 's32[2]{0}', space=sflag, size = 0x8, scoped, tag = 'scoped memory for tpu_custom_call.1']
    #allocation5 [shape = 's32[2]{0}', space=sflag, size = 0x8, scoped, tag = 'scoped memory for tpu_custom_call.1']
    #allocation6 [shape = 'u8[16384]{0}', space=vmem, size = 0x4000, scoped, tag = 'input window, operand 1']
    #allocation7 [shape = 'u8[4096]{0}', space=vmem, size = 0x1000, scoped, tag = 'input window, operand 3, single buffered']
    #allocation8 [shape = 's32[1]{0}', space=sflag, size = 0x4, scoped, tag = 'scoped memory for tpu_custom_call.1']
    #allocation9 [shape = 'u8[4096]{0}', space=vmem, size = 0x1000, scoped, tag = 'input window, operand 4, single buffered']
    #allocation10 [shape = 'u8[4096]{0}', space=vmem, size = 0x1000, scoped, tag = 'input window, operand 8, single buffered']
    #allocation11 [shape = 's32[1]{0}', space=sflag, size = 0x4, scoped, tag = 'scoped memory for tpu_custom_call.1']
    #allocation12 [shape = 'u8[16384]{0}', space=vmem, size = 0x4000, scoped, tag = 'output window, operand 0']
    %15 = vsyncpa [#allocation5], 0
    %16 = vsyncpa [#allocation3], 0
    %s17 = scalar_lea.sflag [#allocation3], 1
    %18 = vsyncpa %s17, 0
    %19 = vsyncpa [#allocation8], 0
    %20 = vsyncpa [#allocation11], 0
    %21 = vsyncpa [#allocation4], 0
    %s22 = scalar_lea.sflag [#allocation4], 1
    %23 = vsyncpa %s22, 0
    loop: start=0, step=1, limit=4
    $region2: #{tpu_custom_call.1} parent=1 // loop_pre_header
      _
    $region3: #{tpu_custom_call.1} parent=1 // loop_header
      %s25 = sphi 0, %s29
      %p26 = scmp.ge.s32.totalorder %s25, 4
      %s33 = sphi 0, %s33
      %s35 = sphi 0, %s33
      %s36 = sphi 0, %s35
      %s50 = sphi 0, %s36
      %s56 = sphi 0, %s58
      %s59 = sphi 0, %s56
      %s60 = sphi 0, %s59
      %s76 = sphi 0, %s60
      %s80 = sphi 0, %s80
      %s82 = sphi 0, %s80
      %s83 = sphi 0, %s82
      %s97 = sphi 0, %s83
      %s101 = sphi 0, %s101
      %s103 = sphi 0, %s101
      %s104 = sphi 0, %s103
      %s118 = sphi 0, %s104
      %s122 = sphi 0, %s122
      %s124 = sphi 0, %s122
      %s125 = sphi 0, %s124
      %s139 = sphi 0, %s125
      %s143 = sphi 0, %s143
      %s145 = sphi 0, %s143
      %s146 = sphi 0, %s145
      %s160 = sphi 0, %s146
      %s164 = sphi 0, %s164
      %s166 = sphi 0, %s164
      %s167 = sphi 0, %s166
      %s181 = sphi 0, %s167
      %s185 = sphi 0, %s185
      %s187 = sphi 0, %s185
      %s188 = sphi 0, %s187
      %s202 = sphi 0, %s188
      %s206 = sphi 0, %s206
      %s208 = sphi 0, %s206
      %s209 = sphi 0, %s208
      %s223 = sphi 0, %s209
      %s227 = sphi 0, %s227
      %s229 = sphi 0, %s227
      %s230 = sphi 0, %s229
      %s244 = sphi 0, %s230
      %s250 = sphi 0, %s252
      %s253 = sphi 0, %s250
      %s254 = sphi 0, %s253
      %s270 = sphi 0, %s254
    $region4: #{tpu_custom_call.1} parent=1 // loop_header_branch
      %28 = sbr.rel (%p26) target = $region8
    $region5: #{tpu_custom_call.1} parent=1 // loop_body
      %s30 = ssub.s32 %s25, 1
      %s31 = ssub.s32 %s25, 2
      %s32 = sadd.s32 %s25, 1
      %s34 = sadd.s32 %s33, 1
      %p37 = scmp.eq.s32.totalorder %s25, 1
      %p38 = scmp.ne.s32.totalorder %s33, %s35
      %p39 = scmp.eq.s32.totalorder %s25, 0
      %p40 = por %p38, %p39
      %p41 = scmp.ne.s32.totalorder %s33, %s35
      %p42 = scmp.eq.s32.totalorder %s30, 1
      %p43 = por %p41, %p42
      %p44 = scmp.ne.s32.totalorder %s35, %s36
      %p45 = scmp.eq.s32.totalorder %s30, 0
      %p46 = por %p44, %p45
      %p47 = scmp.ne.s32.totalorder %s35, %s36
      %p48 = scmp.eq.s32.totalorder %s31, 1
      %p49 = por %p47, %p48
      %p51 = scmp.ne.s32.totalorder %s36, %s50
      %p52 = scmp.eq.s32.totalorder %s31, 0
      %p53 = por %p51, %p52
      %s54 = ssub.s32 %s25, %s32
      %p55 = scmp.eq.s32.totalorder %s54, 0
      %s57 = sadd.s32 %s56, 1
      %s58 = scalar_select %p55, %s56, %s57
      %p61 = pneg %p55
      %p62 = scmp.eq.s32.totalorder %s25, 1
      %p63 = por %p61, %p62
      %p64 = scmp.ne.s32.totalorder %s56, %s59
      %p65 = scmp.eq.s32.totalorder %s25, 0
      %p66 = por %p64, %p65
      %p67 = scmp.ne.s32.totalorder %s56, %s59
      %p68 = scmp.eq.s32.totalorder %s30, 1
      %p69 = por %p67, %p68
      %p70 = scmp.ne.s32.totalorder %s59, %s60
      %p71 = scmp.eq.s32.totalorder %s30, 0
      %p72 = por %p70, %p71
      %p73 = scmp.ne.s32.totalorder %s59, %s60
      %p74 = scmp.eq.s32.totalorder %s31, 1
      %p75 = por %p73, %p74
      %p77 = scmp.ne.s32.totalorder %s60, %s76
      %p78 = scmp.eq.s32.totalorder %s31, 0
      %p79 = por %p77, %p78
      %s81 = sadd.s32 %s80, 1
      %p84 = scmp.eq.s32.totalorder %s25, 1
      %p85 = scmp.ne.s32.totalorder %s80, %s82
      %p86 = scmp.eq.s32.totalorder %s25, 0
      %p87 = por %p85, %p86
      %p88 = scmp.ne.s32.totalorder %s80, %s82
      %p89 = scmp.eq.s32.totalorder %s30, 1
      %p90 = por %p88, %p89
      %p91 = scmp.ne.s32.totalorder %s82, %s83
      %p92 = scmp.eq.s32.totalorder %s30, 0
      %p93 = por %p91, %p92
      %p94 = scmp.ne.s32.totalorder %s82, %s83
      %p95 = scmp.eq.s32.totalorder %s31, 1
      %p96 = por %p94, %p95
      %p98 = scmp.ne.s32.totalorder %s83, %s97
      %p99 = scmp.eq.s32.totalorder %s31, 0
      %p100 = por %p98, %p99
      %s102 = sadd.s32 %s101, 1
      %p105 = scmp.eq.s32.totalorder %s25, 1
      %p106 = scmp.ne.s32.totalorder %s101, %s103
      %p107 = scmp.eq.s32.totalorder %s25, 0
      %p108 = por %p106, %p107
      %p109 = scmp.ne.s32.totalorder %s101, %s103
      %p110 = scmp.eq.s32.totalorder %s30, 1
      %p111 = por %p109, %p110
      %p112 = scmp.ne.s32.totalorder %s103, %s104
      %p113 = scmp.eq.s32.totalorder %s30, 0
      %p114 = por %p112, %p113
      %p115 = scmp.ne.s32.totalorder %s103, %s104
      %p116 = scmp.eq.s32.totalorder %s31, 1
      %p117 = por %p115, %p116
      %p119 = scmp.ne.s32.totalorder %s104, %s118
      %p120 = scmp.eq.s32.totalorder %s31, 0
      %p121 = por %p119, %p120
      %s123 = sadd.s32 %s122, 1
      %p126 = scmp.eq.s32.totalorder %s25, 1
      %p127 = scmp.ne.s32.totalorder %s122, %s124
      %p128 = scmp.eq.s32.totalorder %s25, 0
      %p129 = por %p127, %p128
      %p130 = scmp.ne.s32.totalorder %s122, %s124
      %p131 = scmp.eq.s32.totalorder %s30, 1
      %p132 = por %p130, %p131
      %p133 = scmp.ne.s32.totalorder %s124, %s125
      %p134 = scmp.eq.s32.totalorder %s30, 0
      %p135 = por %p133, %p134
      %p136 = scmp.ne.s32.totalorder %s124, %s125
      %p137 = scmp.eq.s32.totalorder %s31, 1
      %p138 = por %p136, %p137
      %p140 = scmp.ne.s32.totalorder %s125, %s139
      %p141 = scmp.eq.s32.totalorder %s31, 0
      %p142 = por %p140, %p141
      %s144 = sadd.s32 %s143, 1
      %p147 = scmp.eq.s32.totalorder %s25, 1
      %p148 = scmp.ne.s32.totalorder %s143, %s145
      %p149 = scmp.eq.s32.totalorder %s25, 0
      %p150 = por %p148, %p149
      %p151 = scmp.ne.s32.totalorder %s143, %s145
      %p152 = scmp.eq.s32.totalorder %s30, 1
      %p153 = por %p151, %p152
      %p154 = scmp.ne.s32.totalorder %s145, %s146
      %p155 = scmp.eq.s32.totalorder %s30, 0
      %p156 = por %p154, %p155
      %p157 = scmp.ne.s32.totalorder %s145, %s146
      %p158 = scmp.eq.s32.totalorder %s31, 1
      %p159 = por %p157, %p158
      %p161 = scmp.ne.s32.totalorder %s146, %s160
      %p162 = scmp.eq.s32.totalorder %s31, 0
      %p163 = por %p161, %p162
      %s165 = sadd.s32 %s164, 1
      %p168 = scmp.eq.s32.totalorder %s25, 1
      %p169 = scmp.ne.s32.totalorder %s164, %s166
      %p170 = scmp.eq.s32.totalorder %s25, 0
      %p171 = por %p169, %p170
      %p172 = scmp.ne.s32.totalorder %s164, %s166
      %p173 = scmp.eq.s32.totalorder %s30, 1
      %p174 = por %p172, %p173
      %p175 = scmp.ne.s32.totalorder %s166, %s167
      %p176 = scmp.eq.s32.totalorder %s30, 0
      %p177 = por %p175, %p176
      %p178 = scmp.ne.s32.totalorder %s166, %s167
      %p179 = scmp.eq.s32.totalorder %s31, 1
      %p180 = por %p178, %p179
      %p182 = scmp.ne.s32.totalorder %s167, %s181
      %p183 = scmp.eq.s32.totalorder %s31, 0
      %p184 = por %p182, %p183
      %s186 = sadd.s32 %s185, 1
      %p189 = scmp.eq.s32.totalorder %s25, 1
      %p190 = scmp.ne.s32.totalorder %s185, %s187
      %p191 = scmp.eq.s32.totalorder %s25, 0
      %p192 = por %p190, %p191
      %p193 = scmp.ne.s32.totalorder %s185, %s187
      %p194 = scmp.eq.s32.totalorder %s30, 1
      %p195 = por %p193, %p194
      %p196 = scmp.ne.s32.totalorder %s187, %s188
      %p197 = scmp.eq.s32.totalorder %s30, 0
      %p198 = por %p196, %p197
      %p199 = scmp.ne.s32.totalorder %s187, %s188
      %p200 = scmp.eq.s32.totalorder %s31, 1
      %p201 = por %p199, %p200
      %p203 = scmp.ne.s32.totalorder %s188, %s202
      %p204 = scmp.eq.s32.totalorder %s31, 0
      %p205 = por %p203, %p204
      %s207 = sadd.s32 %s206, 1
      %p210 = scmp.eq.s32.totalorder %s25, 1
      %p211 = scmp.ne.s32.totalorder %s206, %s208
      %p212 = scmp.eq.s32.totalorder %s25, 0
      %p213 = por %p211, %p212
      %p214 = scmp.ne.s32.totalorder %s206, %s208
      %p215 = scmp.eq.s32.totalorder %s30, 1
      %p216 = por %p214, %p215
      %p217 = scmp.ne.s32.totalorder %s208, %s209
      %p218 = scmp.eq.s32.totalorder %s30, 0
      %p219 = por %p217, %p218
      %p220 = scmp.ne.s32.totalorder %s208, %s209
      %p221 = scmp.eq.s32.totalorder %s31, 1
      %p222 = por %p220, %p221
      %p224 = scmp.ne.s32.totalorder %s209, %s223
      %p225 = scmp.eq.s32.totalorder %s31, 0
      %p226 = por %p224, %p225
      %s228 = sadd.s32 %s227, 1
      %p231 = scmp.eq.s32.totalorder %s25, 1
      %p232 = scmp.ne.s32.totalorder %s227, %s229
      %p233 = scmp.eq.s32.totalorder %s25, 0
      %p234 = por %p232, %p233
      %p235 = scmp.ne.s32.totalorder %s227, %s229
      %p236 = scmp.eq.s32.totalorder %s30, 1
      %p237 = por %p235, %p236
      %p238 = scmp.ne.s32.totalorder %s229, %s230
      %p239 = scmp.eq.s32.totalorder %s30, 0
      %p240 = por %p238, %p239
      %p241 = scmp.ne.s32.totalorder %s229, %s230
      %p242 = scmp.eq.s32.totalorder %s31, 1
      %p243 = por %p241, %p242
      %p245 = scmp.ne.s32.totalorder %s230, %s244
      %p246 = scmp.eq.s32.totalorder %s31, 0
      %p247 = por %p245, %p246
      %s248 = ssub.s32 %s25, %s32
      %p249 = scmp.eq.s32.totalorder %s248, 0
      %s251 = sadd.s32 %s250, 1
      %s252 = scalar_select %p249, %s250, %s251
      %p255 = pneg %p249
      %p256 = scmp.eq.s32.totalorder %s25, 1
      %p257 = por %p255, %p256
      %p258 = scmp.ne.s32.totalorder %s250, %s253
      %p259 = scmp.eq.s32.totalorder %s25, 0
      %p260 = por %p258, %p259
      %p261 = scmp.ne.s32.totalorder %s250, %s253
      %p262 = scmp.eq.s32.totalorder %s30, 1
      %p263 = por %p261, %p262
      %p264 = scmp.ne.s32.totalorder %s253, %s254
      %p265 = scmp.eq.s32.totalorder %s30, 0
      %p266 = por %p264, %p265
      %p267 = scmp.ne.s32.totalorder %s253, %s254
      %p268 = scmp.eq.s32.totalorder %s31, 1
      %p269 = por %p267, %p268
      %p271 = scmp.ne.s32.totalorder %s254, %s270
      %p272 = scmp.eq.s32.totalorder %s31, 0
      %p273 = por %p271, %p272
      %p274 = scmp.le.s32.totalorder 1, %s25
      %p275 = scmp.lt.s32.totalorder %s25, 3
      %p276 = pnand %p274, %p275
      %p277 = pneg %p276
      // Predicated region
      $region9: #{tpu_custom_call.1} parent=5 // pred_check
        _
      $region10: #{tpu_custom_call.1} parent=5 // pred_check_branch
        %279 = sbr.rel (%p276) target = $region12
      $region11: #{tpu_custom_call.1} parent=5 // pred_region
        %s280 = ssub.s32 %s25, 1
        // Predicated region
        $region13: #{tpu_custom_call.1} parent=11 // pred_check
          %p281 = pneg %p46
        $region14: #{tpu_custom_call.1} parent=11 // pred_check_branch
          %283 = sbr.rel (%p281) target = $region16
        $region15: #{tpu_custom_call.1} parent=11 // pred_region
          %s285 = ssub.s32 16, 16
          %286 = vsyncadd [#allocation5], %s285
          %s288 = sshll.u32 %s0, 4
          %s289 = int_to_ptr.vmem [resolvable:$true] %s288
          %291 = dma.vmem_to_smem %s289, 16, [#allocation2], [#allocation5]
        $region16: #{tpu_custom_call.1} parent=11 // pred_fallthru
          _
        // Predicated region
        $region17: #{tpu_custom_call.1} parent=11 // pred_check
          %p292 = pneg %p93
        $region18: #{tpu_custom_call.1} parent=11 // pred_check_branch
          %294 = sbr.rel (%p292) target = $region20
        $region19: #{tpu_custom_call.1} parent=11 // pred_region
          _
        $region20: #{tpu_custom_call.1} parent=11 // pred_fallthru
          _
        // Predicated region
        $region21: #{tpu_custom_call.1} parent=11 // pred_check
          %p295 = pneg %p114
        $region22: #{tpu_custom_call.1} parent=11 // pred_check_branch
          %297 = sbr.rel (%p295) target = $region24
        $region23: #{tpu_custom_call.1} parent=11 // pred_region
          %s299 = ssub.s32 128, 128
          %300 = vsyncadd [#allocation8], %s299
          %s302 = sshll.u32 [#allocation7], 4
          %s303 = int_to_ptr.vmem [resolvable:$true] %s302
          %305 = dma.hbm_to_vmem [thread:$0]  %s3, 128, %s303, [#allocation8]
        $region24: #{tpu_custom_call.1} parent=11 // pred_fallthru
          _
        // Predicated region
        $region25: #{tpu_custom_call.1} parent=11 // pred_check
          %p306 = pneg %p135
        $region26: #{tpu_custom_call.1} parent=11 // pred_check_branch
          %308 = sbr.rel (%p306) target = $region28
        $region27: #{tpu_custom_call.1} parent=11 // pred_region
          %s310 = ssub.s32 128, 128
          %311 = vsyncadd [#allocation8], %s310
          %s313 = sshll.u32 [#allocation9], 4
          %s314 = int_to_ptr.vmem [resolvable:$true] %s313
          %316 = dma.hbm_to_vmem [thread:$0]  %s4, 128, %s314, [#allocation8]
        $region28: #{tpu_custom_call.1} parent=11 // pred_fallthru
          _
        // Predicated region
        $region29: #{tpu_custom_call.1} parent=11 // pred_check
          %p317 = pneg %p156
        $region30: #{tpu_custom_call.1} parent=11 // pred_check_branch
          %319 = sbr.rel (%p317) target = $region32
        $region31: #{tpu_custom_call.1} parent=11 // pred_region
          _
        $region32: #{tpu_custom_call.1} parent=11 // pred_fallthru
          _
        // Predicated region
        $region33: #{tpu_custom_call.1} parent=11 // pred_check
          %p320 = pneg %p177
        $region34: #{tpu_custom_call.1} parent=11 // pred_check_branch
          %322 = sbr.rel (%p320) target = $region36
        $region35: #{tpu_custom_call.1} parent=11 // pred_region
          _
        $region36: #{tpu_custom_call.1} parent=11 // pred_fallthru
          _
        // Predicated region
        $region37: #{tpu_custom_call.1} parent=11 // pred_check
          %p323 = pneg %p198
        $region38: #{tpu_custom_call.1} parent=11 // pred_check_branch
          %325 = sbr.rel (%p323) target = $region40
        $region39: #{tpu_custom_call.1} parent=11 // pred_region
          _
        $region40: #{tpu_custom_call.1} parent=11 // pred_fallthru
          _
        // Predicated region
        $region41: #{tpu_custom_call.1} parent=11 // pred_check
          %p326 = pneg %p219
        $region42: #{tpu_custom_call.1} parent=11 // pred_check_branch
          %328 = sbr.rel (%p326) target = $region44
        $region43: #{tpu_custom_call.1} parent=11 // pred_region
          %s330 = ssub.s32 128, 128
          %331 = vsyncadd [#allocation11], %s330
          %s333 = sshll.u32 [#allocation10], 4
          %s334 = int_to_ptr.vmem [resolvable:$true] %s333
          %336 = dma.hbm_to_vmem [thread:$0]  %s8, 128, %s334, [#allocation11]
        $region44: #{tpu_custom_call.1} parent=11 // pred_fallthru
          _
        // Predicated region
        $region45: #{tpu_custom_call.1} parent=11 // pred_check
          %p337 = pneg %p240
        $region46: #{tpu_custom_call.1} parent=11 // pred_check_branch
          %339 = sbr.rel (%p337) target = $region48
        $region47: #{tpu_custom_call.1} parent=11 // pred_region
          _
        $region48: #{tpu_custom_call.1} parent=11 // pred_fallthru
          _
      $region12: #{tpu_custom_call.1} parent=5 // pred_fallthru
        _
      %p340 = scmp.lt.s32.totalorder %s25, 2
      // Predicated region
      $region49: #{tpu_custom_call.1} parent=5 // pred_check
        %p341 = pneg %p340
      $region50: #{tpu_custom_call.1} parent=5 // pred_check_branch
        %343 = sbr.rel (%p341) target = $region52
      $region51: #{tpu_custom_call.1} parent=5 // pred_region
        // Predicated region
        $region53: #{tpu_custom_call.1} parent=51 // pred_check
          %p344 = pneg %p66
        $region54: #{tpu_custom_call.1} parent=51 // pred_check_branch
          %346 = sbr.rel (%p344) target = $region56
        $region55: #{tpu_custom_call.1} parent=51 // pred_region
          %s347 = sand.u32 %s56, 1
          %s348 = scalar_lea.sflag [#allocation3], %s347
          %s349 = sand.u32 %s56, 1
          %s350 = smul.addr %s349, 16
          %s351 = scalar_lea.vmem [#allocation6], %s350
          %s353 = ssub.s32 256, 256
          %354 = vsyncadd %s348, %s353
          %s355 = smul.addr %s25, 2
          %s356 = smul.addr %s355, 128
          %s357 = scalar_lea.hbm %s1, %s356
          %s358 = sshll.u32 %s351, 4
          %s359 = int_to_ptr.vmem [resolvable:$true] %s358
          %364 = dma.hbm_to_vmem [thread:$0]  %s357, 256, %s359, %s348, 128, 128, 8
        $region56: #{tpu_custom_call.1} parent=51 // pred_fallthru
          _
      $region52: #{tpu_custom_call.1} parent=5 // pred_fallthru
        _
      %p365 = scmp.le.s32.totalorder 1, %s25
      %p366 = scmp.lt.s32.totalorder %s25, 3
      %p367 = pnand %p365, %p366
      %p368 = pneg %p367
      // Predicated region
      $region57: #{tpu_custom_call.1} parent=5 // pred_check
        _
      $region58: #{tpu_custom_call.1} parent=5 // pred_check_branch
        %370 = sbr.rel (%p367) target = $region60
      $region59: #{tpu_custom_call.1} parent=5 // pred_region
        %s371 = ssub.s32 %s25, 1
        // Predicated region
        $region61: #{tpu_custom_call.1} parent=59 // pred_check
          %p372 = pneg %p46
        $region62: #{tpu_custom_call.1} parent=59 // pred_check_branch
          %374 = sbr.rel (%p372) target = $region64
        $region63: #{tpu_custom_call.1} parent=59 // pred_region
          %375 = dma.done [#allocation5], 16
        $region64: #{tpu_custom_call.1} parent=59 // pred_fallthru
          _
        %s376 = sand.u32 %s59, 1
        %s377 = scalar_lea.sflag [#allocation3], %s376
        %s378 = sand.u32 %s59, 1
        %s379 = smul.addr %s378, 16
        %s380 = scalar_lea.vmem [#allocation6], %s379
        // Predicated region
        $region65: #{tpu_custom_call.1} parent=59 // pred_check
          %p381 = pneg %p72
        $region66: #{tpu_custom_call.1} parent=59 // pred_check_branch
          %383 = sbr.rel (%p381) target = $region68
        $region67: #{tpu_custom_call.1} parent=59 // pred_region
          %384 = dma.done %s377, 256
        $region68: #{tpu_custom_call.1} parent=59 // pred_fallthru
          _
        // Predicated region
        $region69: #{tpu_custom_call.1} parent=59 // pred_check
          %p385 = pneg %p114
        $region70: #{tpu_custom_call.1} parent=59 // pred_check_branch
          %387 = sbr.rel (%p385) target = $region72
        $region71: #{tpu_custom_call.1} parent=59 // pred_region
          %388 = dma.done [#allocation8], 128
        $region72: #{tpu_custom_call.1} parent=59 // pred_fallthru
          _
        // Predicated region
        $region73: #{tpu_custom_call.1} parent=59 // pred_check
          %p389 = pneg %p135
        $region74: #{tpu_custom_call.1} parent=59 // pred_check_branch
          %391 = sbr.rel (%p389) target = $region76
        $region75: #{tpu_custom_call.1} parent=59 // pred_region
          %392 = dma.done [#allocation8], 128
        $region76: #{tpu_custom_call.1} parent=59 // pred_fallthru
          _
        // Predicated region
        $region77: #{tpu_custom_call.1} parent=59 // pred_check
          %p393 = pneg %p219
        $region78: #{tpu_custom_call.1} parent=59 // pred_check_branch
          %395 = sbr.rel (%p393) target = $region80
        $region79: #{tpu_custom_call.1} parent=59 // pred_region
          %396 = dma.done [#allocation11], 128
        $region80: #{tpu_custom_call.1} parent=59 // pred_fallthru
          _
        %397 = sfence
        %p398 = pneg %p46
        %p399 = pneg %p43
        %s400 = sand.u32 %s59, 1
        %s401 = scalar_lea.sflag [#allocation3], %s400
        %s402 = sand.u32 %s59, 1
        %s403 = smul.addr %s402, 16
        %s404 = scalar_lea.vmem [#allocation6], %s403
        %p405 = pneg %p72
        %p406 = pneg %p69
        %p407 = pneg %p93
        %p408 = pneg %p90
        %p409 = pneg %p114
        %p410 = pneg %p111
        %p411 = pneg %p135
        %p412 = pneg %p132
        %p413 = pneg %p156
        %p414 = pneg %p153
        %p415 = pneg %p177
        %p416 = pneg %p174
        %p417 = pneg %p198
        %p418 = pneg %p195
        %p419 = pneg %p219
        %p420 = pneg %p216
        %p421 = pneg %p240
        %p422 = pneg %p237
        %p423 = pneg %p266
        %p424 = pneg %p263
        %s425 = sand.u32 %s253, 1
        %s426 = scalar_lea.sflag [#allocation4], %s425
        %s427 = sand.u32 %s253, 1
        %s428 = smul.addr %s427, 16
        %s429 = scalar_lea.vmem [#allocation12], %s428
        %s430 = sld [smem:[#allocation2]]
        %s431 = sld [smem:[#allocation2 + $0x1]]
        %s432 = sld [smem:[#allocation2 + $0x2]]
        %v433 = vlaneseq
        %v434 = vand.u32 %v433, 127
        %v435 = vld [vmem:[%s380] sm:$0xff]
        %v436 = vld [vmem:[%s380 + $0x8] sm:$0xff]
        %v437 = vld [vmem:[%s2] sm:$0xff]
        %v438 = vld [vmem:[%s6] sm:$0xff]
        %vm439 = vcmask 130048
        %v441 = vsel %vm439, %v437, 0
        %443 = vmatprep.subr.mxu0 0.0
        %444 = vmatpush1.msra.mxu0 %v435
        %445 = vmatprep.subr.mxu0 0.0
        %446 = vmatpush1.msra.mxu0 %v436
        %447 = vmatprep.subr.mxu0 0.0
        %448 = vmatpush1.msra.mxu0 0.0
        %449 = vmatprep.subr.mxu0 0.0
        %450 = vmatpush1.msra.mxu0 0.0
        %451 = vmatprep.subr.mxu0 0.0
        %452 = vmatpush1.msra.mxu0 0.0
        %453 = vmatprep.subr.mxu0 0.0
        %454 = vmatpush1.msra.mxu0 0.0
        %455 = vmatprep.subr.mxu0 0.0
        %456 = vmatpush1.msra.mxu0 0.0
        %457 = vmatprep.subr.mxu0 0.0
        %458 = vmatpush1.msra.mxu0 0.0
        %459 = vmatprep.subr.mxu0 0.0
        %460 = vmatpush1.msra.mxu0 0.0
        %461 = vmatprep.subr.mxu0 0.0
        %462 = vmatpush1.msra.mxu0 0.0
        %463 = vmatprep.subr.mxu0 0.0
        %464 = vmatpush1.msra.mxu0 0.0
        %465 = vmatprep.subr.mxu0 0.0
        %466 = vmatpush1.msra.mxu0 0.0
        %467 = vmatprep.subr.mxu0 0.0
        %468 = vmatpush1.msra.mxu0 0.0
        %469 = vmatprep.subr.mxu0 0.0
        %470 = vmatpush1.msra.mxu0 0.0
        %471 = vmatprep.subr.mxu0 0.0
        %472 = vmatpush1.msra.mxu0 0.0
        %473 = vmatprep.subr.mxu0 0.0
        %474 = vmatpush1.msra.mxu0 0.0
        %475 = vmatprep.subr.mxu0 0.0
        %476 = vmatpush1.msra.mxu0 0.0
        %477 = vmatprep.subr.mxu0 0.0
        %478 = vmatpush1.msra.mxu0 0.0
        %479 = vmatprep.subr.mxu0 0.0
        %480 = vmatpush1.msra.mxu0 0.0
        %481 = vmatprep.subr.mxu0 0.0
        %482 = vmatpush1.msra.mxu0 0.0
        %483 = vmatprep.subr.mxu0 0.0
        %484 = vmatpush1.msra.mxu0 0.0
        %485 = vmatprep.subr.mxu0 0.0
        %486 = vmatpush1.msra.mxu0 0.0
        %487 = vmatprep.subr.mxu0 0.0
        %488 = vmatpush1.msra.mxu0 0.0
        %489 = vmatprep.subr.mxu0 0.0
        %490 = vmatpush1.msra.mxu0 0.0
        %491 = vmatprep.subr.mxu0 0.0
        %492 = vmatpush1.msra.mxu0 0.0
        %493 = vmatprep.subr.mxu0 0.0
        %494 = vmatpush1.msra.mxu0 0.0
        %495 = vmatprep.subr.mxu0 0.0
        %496 = vmatpush1.msra.mxu0 0.0
        %497 = vmatprep.subr.mxu0 0.0
        %498 = vmatpush1.msra.mxu0 0.0
        %499 = vmatprep.subr.mxu0 0.0
        %500 = vmatpush1.msra.mxu0 0.0
        %501 = vmatprep.subr.mxu0 0.0
        %502 = vmatpush1.msra.mxu0 0.0
        %503 = vmatprep.subr.mxu0 0.0
        %504 = vmatpush1.msra.mxu0 0.0
        %505 = vmatprep.subr.mxu0 0.0
        %506 = vmatpush1.msra.mxu0 0.0
        %507 = vmatprep.mubr.f32.mxu0 0.0
        %508 = vmatmul.mubr.f32.gmra.mrb[0].mxu0 %v441
        %v509 = vpop.f32.mrb[0].mxu0
        %v510 = vadd.f32 %v438, %v509
        %v511 = vpop.f32.mrb[0].mxu0
        %512 = vdwg.mxu0
        %vm513 = vcmp.ge.f32.partialorder %v510, 0.0
        %v514 = vstv %s430
        %v515 = vmul.f32 %v514, %v510
        %v516 = vsel %vm513, %v510, %v515
        %517 = vrot.lane.b32.xlu0 %v516, 20
        %v518 = vpop.permute.xlu0 %517
        %vm519 = vcmp.ge.s32.totalorder %v434, 20
        %v520 = vsel %vm519, %v518, 0.0
        %521 = vrot.lane.b32.xlu0 %v516, 18
        %v522 = vpop.permute.xlu0 %521
        %vm523 = vcmp.ge.s32.totalorder %v434, 18
        %v524 = vsel %vm523, %v522, 0.0
        %525 = vrot.lane.b32.xlu0 %v516, 16
        %v526 = vpop.permute.xlu0 %525
        %vm527 = vcmp.ge.s32.totalorder %v434, 16
        %v528 = vsel %vm527, %v526, 0.0
        %529 = vrot.lane.b32.xlu0 %v516, 14
        %v530 = vpop.permute.xlu0 %529
        %vm531 = vcmp.ge.s32.totalorder %v434, 14
        %v532 = vsel %vm531, %v530, 0.0
        %533 = vrot.lane.b32.xlu0 %v516, 12
        %v534 = vpop.permute.xlu0 %533
        %vm535 = vcmp.ge.s32.totalorder %v434, 12
        %v536 = vsel %vm535, %v534, 0.0
        %537 = vrot.lane.b32.xlu0 %v516, 10
        %v538 = vpop.permute.xlu0 %537
        %vm539 = vcmp.ge.s32.totalorder %v434, 10
        %v540 = vsel %vm539, %v538, 0.0
        %541 = vrot.lane.b32.xlu0 %v516, 8
        %v542 = vpop.permute.xlu0 %541
        %vm543 = vcmp.ge.s32.totalorder %v434, 8
        %v544 = vsel %vm543, %v542, 0.0
        %545 = vrot.lane.b32.xlu0 %v516, 6
        %v546 = vpop.permute.xlu0 %545
        %vm547 = vcmp.ge.s32.totalorder %v434, 6
        %v548 = vsel %vm547, %v546, 0.0
        %549 = vrot.lane.b32.xlu0 %v516, 4
        %v550 = vpop.permute.xlu0 %549
        %vm551 = vcmp.ge.s32.totalorder %v434, 4
        %v552 = vsel %vm551, %v550, 0.0
        %553 = vrot.lane.b32.xlu0 %v516, 2
        %v554 = vpop.permute.xlu0 %553
        %vm555 = vcmp.ge.s32.totalorder %v434, 2
        %v556 = vsel %vm555, %v554, 0.0
        %v557 = vstv %s431
        %v558 = vmul.f32 %v557, %v510
        %v559 = vsel %vm513, %v510, %v558
        %560 = vrot.lane.b32.xlu0 %v559, 20
        %v561 = vpop.permute.xlu0 %560
        %v562 = vsel %vm519, %v561, 0.0
        %563 = vrot.lane.b32.xlu0 %v559, 18
        %v564 = vpop.permute.xlu0 %563
        %v565 = vsel %vm523, %v564, 0.0
        %566 = vrot.lane.b32.xlu0 %v559, 16
        %v567 = vpop.permute.xlu0 %566
        %v568 = vsel %vm527, %v567, 0.0
        %569 = vrot.lane.b32.xlu0 %v559, 14
        %v570 = vpop.permute.xlu0 %569
        %v571 = vsel %vm531, %v570, 0.0
        %572 = vrot.lane.b32.xlu0 %v559, 12
        %v573 = vpop.permute.xlu0 %572
        %v574 = vsel %vm535, %v573, 0.0
        %575 = vrot.lane.b32.xlu0 %v559, 10
        %v576 = vpop.permute.xlu0 %575
        %v577 = vsel %vm539, %v576, 0.0
        %578 = vrot.lane.b32.xlu0 %v559, 8
        %v579 = vpop.permute.xlu0 %578
        %v580 = vsel %vm543, %v579, 0.0
        %581 = vrot.lane.b32.xlu0 %v559, 6
        %v582 = vpop.permute.xlu0 %581
        %v583 = vsel %vm547, %v582, 0.0
        %584 = vrot.lane.b32.xlu0 %v559, 4
        %v585 = vpop.permute.xlu0 %584
        %v586 = vsel %vm551, %v585, 0.0
        %587 = vrot.lane.b32.xlu0 %v559, 2
        %v588 = vpop.permute.xlu0 %587
        %v589 = vsel %vm555, %v588, 0.0
        %v590 = vld [vmem:[#allocation7] sm:$0xff]
        %v591 = vld [vmem:[%s7] sm:$0xff]
        %vm592 = vcmask 719872
        %v594 = vsel %vm592, %v590, 0
        %596 = vmatprep.subr.mxu0 0.0
        %597 = vmatpush1.msra.mxu0 %v520
        %598 = vmatprep.subr.mxu0 0.0
        %599 = vmatpush1.msra.mxu0 %v524
        %600 = vmatprep.subr.mxu0 0.0
        %601 = vmatpush1.msra.mxu0 %v528
        %602 = vmatprep.subr.mxu0 0.0
        %603 = vmatpush1.msra.mxu0 %v532
        %604 = vmatprep.subr.mxu0 0.0
        %605 = vmatpush1.msra.mxu0 %v536
        %606 = vmatprep.subr.mxu0 0.0
        %607 = vmatpush1.msra.mxu0 %v540
        %608 = vmatprep.subr.mxu0 0.0
        %609 = vmatpush1.msra.mxu0 %v544
        %610 = vmatprep.subr.mxu0 0.0
        %611 = vmatpush1.msra.mxu0 %v548
        %612 = vmatprep.subr.mxu0 0.0
        %613 = vmatpush1.msra.mxu0 %v552
        %614 = vmatprep.subr.mxu0 0.0
        %615 = vmatpush1.msra.mxu0 %v556
        %616 = vmatprep.subr.mxu0 0.0
        %617 = vmatpush1.msra.mxu0 %v516
        %618 = vmatprep.subr.mxu0 0.0
        %619 = vmatpush1.msra.mxu0 0.0
        %620 = vmatprep.subr.mxu0 0.0
        %621 = vmatpush1.msra.mxu0 0.0
        %622 = vmatprep.subr.mxu0 0.0
        %623 = vmatpush1.msra.mxu0 0.0
        %624 = vmatprep.subr.mxu0 0.0
        %625 = vmatpush1.msra.mxu0 0.0
        %626 = vmatprep.subr.mxu0 0.0
        %627 = vmatpush1.msra.mxu0 0.0
        %628 = vmatprep.subr.mxu0 0.0
        %629 = vmatpush1.msra.mxu0 0.0
        %630 = vmatprep.subr.mxu0 0.0
        %631 = vmatpush1.msra.mxu0 0.0
        %632 = vmatprep.subr.mxu0 0.0
        %633 = vmatpush1.msra.mxu0 0.0
        %634 = vmatprep.subr.mxu0 0.0
        %635 = vmatpush1.msra.mxu0 0.0
        %636 = vmatprep.subr.mxu0 0.0
        %637 = vmatpush1.msra.mxu0 0.0
        %638 = vmatprep.subr.mxu0 0.0
        %639 = vmatpush1.msra.mxu0 0.0
        %640 = vmatprep.subr.mxu0 0.0
        %641 = vmatpush1.msra.mxu0 0.0
        %642 = vmatprep.subr.mxu0 0.0
        %643 = vmatpush1.msra.mxu0 0.0
        %644 = vmatprep.subr.mxu0 0.0
        %645 = vmatpush1.msra.mxu0 0.0
        %646 = vmatprep.subr.mxu0 0.0
        %647 = vmatpush1.msra.mxu0 0.0
        %648 = vmatprep.subr.mxu0 0.0
        %649 = vmatpush1.msra.mxu0 0.0
        %650 = vmatprep.subr.mxu0 0.0
        %651 = vmatpush1.msra.mxu0 0.0
        %652 = vmatprep.subr.mxu0 0.0
        %653 = vmatpush1.msra.mxu0 0.0
        %654 = vmatprep.subr.mxu0 0.0
        %655 = vmatpush1.msra.mxu0 0.0
        %656 = vmatprep.subr.mxu0 0.0
        %657 = vmatpush1.msra.mxu0 0.0
        %658 = vmatprep.subr.mxu0 0.0
        %659 = vmatpush1.msra.mxu0 0.0
        %660 = vmatprep.mubr.f32.mxu0 0.0
        %661 = vmatmul.mubr.f32.gmra.mrb[0].mxu0 %v594
        %v662 = vpop.f32.mrb[0].mxu0
        %v663 = vadd.f32 %v591, %v662
        %v664 = vpop.f32.mrb[0].mxu0
        %665 = vdwg.mxu0
        %v666 = vld [vmem:[#allocation9] sm:$0xff]
        %v667 = vld [vmem:[#allocation10] sm:$0xff]
        %v669 = vsel %vm592, %v666, 0
        %671 = vmatprep.subr.mxu0 0.0
        %672 = vmatpush1.msra.mxu0 %v562
        %673 = vmatprep.subr.mxu0 0.0
        %674 = vmatpush1.msra.mxu0 %v565
        %675 = vmatprep.subr.mxu0 0.0
        %676 = vmatpush1.msra.mxu0 %v568
        %677 = vmatprep.subr.mxu0 0.0
        %678 = vmatpush1.msra.mxu0 %v571
        %679 = vmatprep.subr.mxu0 0.0
        %680 = vmatpush1.msra.mxu0 %v574
        %681 = vmatprep.subr.mxu0 0.0
        %682 = vmatpush1.msra.mxu0 %v577
        %683 = vmatprep.subr.mxu0 0.0
        %684 = vmatpush1.msra.mxu0 %v580
        %685 = vmatprep.subr.mxu0 0.0
        %686 = vmatpush1.msra.mxu0 %v583
        %687 = vmatprep.subr.mxu0 0.0
        %688 = vmatpush1.msra.mxu0 %v586
        %689 = vmatprep.subr.mxu0 0.0
        %690 = vmatpush1.msra.mxu0 %v589
        %691 = vmatprep.subr.mxu0 0.0
        %692 = vmatpush1.msra.mxu0 %v559
        %693 = vmatprep.subr.mxu0 0.0
        %694 = vmatpush1.msra.mxu0 0.0
        %695 = vmatprep.subr.mxu0 0.0
        %696 = vmatpush1.msra.mxu0 0.0
        %697 = vmatprep.subr.mxu0 0.0
        %698 = vmatpush1.msra.mxu0 0.0
        %699 = vmatprep.subr.mxu0 0.0
        %700 = vmatpush1.msra.mxu0 0.0
        %701 = vmatprep.subr.mxu0 0.0
        %702 = vmatpush1.msra.mxu0 0.0
        %703 = vmatprep.subr.mxu0 0.0
        %704 = vmatpush1.msra.mxu0 0.0
        %705 = vmatprep.subr.mxu0 0.0
        %706 = vmatpush1.msra.mxu0 0.0
        %707 = vmatprep.subr.mxu0 0.0
        %708 = vmatpush1.msra.mxu0 0.0
        %709 = vmatprep.subr.mxu0 0.0
        %710 = vmatpush1.msra.mxu0 0.0
        %711 = vmatprep.subr.mxu0 0.0
        %712 = vmatpush1.msra.mxu0 0.0
        %713 = vmatprep.subr.mxu0 0.0
        %714 = vmatpush1.msra.mxu0 0.0
        %715 = vmatprep.subr.mxu0 0.0
        %716 = vmatpush1.msra.mxu0 0.0
        %717 = vmatprep.subr.mxu0 0.0
        %718 = vmatpush1.msra.mxu0 0.0
        %719 = vmatprep.subr.mxu0 0.0
        %720 = vmatpush1.msra.mxu0 0.0
        %721 = vmatprep.subr.mxu0 0.0
        %722 = vmatpush1.msra.mxu0 0.0
        %723 = vmatprep.subr.mxu0 0.0
        %724 = vmatpush1.msra.mxu0 0.0
        %725 = vmatprep.subr.mxu0 0.0
        %726 = vmatpush1.msra.mxu0 0.0
        %727 = vmatprep.subr.mxu0 0.0
        %728 = vmatpush1.msra.mxu0 0.0
        %729 = vmatprep.subr.mxu0 0.0
        %730 = vmatpush1.msra.mxu0 0.0
        %731 = vmatprep.subr.mxu0 0.0
        %732 = vmatpush1.msra.mxu0 0.0
        %733 = vmatprep.subr.mxu0 0.0
        %734 = vmatpush1.msra.mxu0 0.0
        %735 = vmatprep.mubr.f32.mxu0 0.0
        %736 = vmatmul.mubr.f32.gmra.mrb[0].mxu0 %v669
        %v737 = vpop.f32.mrb[0].mxu0
        %v738 = vadd.f32 %v667, %v737
        %v739 = vpop.f32.mrb[0].mxu0
        %740 = vdwg.mxu0
        %v741 = vxor.u32 %v738, 2147483648
        %v742 = vmul.f32 %v741, 1.442695
        %v743 = vpow.pop %v742
        %v744 = vadd.f32 %v743, 1.0
        %v745 = vrcp.pop %v744
        %v746 = vmul.f32 1.0, %v745
        %v747 = vmul.f32 %v663, %v746
        %v748 = vld [vmem:[%s5] sm:$0xff]
        %v749 = vld [vmem:[%s5 + $0x8] sm:$0xff]
        %v750 = vld [vmem:[%s9] sm:$0xff]
        %v751 = vld [vmem:[%s9 + $0x8] sm:$0xff]
        %vm752 = vcmask 64512
        %v754 = vsel %vm752, %v748, 0
        %v757 = vsel %vm752, %v749, 0
        %759 = vmatprep.subr.mxu0 0.0
        %760 = vmatpush1.msra.mxu0 %v747
        %761 = vmatprep.subr.mxu0 0.0
        %762 = vmatpush1.msra.mxu0 0.0
        %763 = vmatprep.subr.mxu0 0.0
        %764 = vmatpush1.msra.mxu0 0.0
        %765 = vmatprep.subr.mxu0 0.0
        %766 = vmatpush1.msra.mxu0 0.0
        %767 = vmatprep.subr.mxu0 0.0
        %768 = vmatpush1.msra.mxu0 0.0
        %769 = vmatprep.subr.mxu0 0.0
        %770 = vmatpush1.msra.mxu0 0.0
        %771 = vmatprep.subr.mxu0 0.0
        %772 = vmatpush1.msra.mxu0 0.0
        %773 = vmatprep.subr.mxu0 0.0
        %774 = vmatpush1.msra.mxu0 0.0
        %775 = vmatprep.subr.mxu0 0.0
        %776 = vmatpush1.msra.mxu0 0.0
        %777 = vmatprep.subr.mxu0 0.0
        %778 = vmatpush1.msra.mxu0 0.0
        %779 = vmatprep.subr.mxu0 0.0
        %780 = vmatpush1.msra.mxu0 0.0
        %781 = vmatprep.subr.mxu0 0.0
        %782 = vmatpush1.msra.mxu0 0.0
        %783 = vmatprep.subr.mxu0 0.0
        %784 = vmatpush1.msra.mxu0 0.0
        %785 = vmatprep.subr.mxu0 0.0
        %786 = vmatpush1.msra.mxu0 0.0
        %787 = vmatprep.subr.mxu0 0.0
        %788 = vmatpush1.msra.mxu0 0.0
        %789 = vmatprep.subr.mxu0 0.0
        %790 = vmatpush1.msra.mxu0 0.0
        %791 = vmatprep.subr.mxu0 0.0
        %792 = vmatpush1.msra.mxu0 0.0
        %793 = vmatprep.subr.mxu0 0.0
        %794 = vmatpush1.msra.mxu0 0.0
        %795 = vmatprep.subr.mxu0 0.0
        %796 = vmatpush1.msra.mxu0 0.0
        %797 = vmatprep.subr.mxu0 0.0
        %798 = vmatpush1.msra.mxu0 0.0
        %799 = vmatprep.subr.mxu0 0.0
        %800 = vmatpush1.msra.mxu0 0.0
        %801 = vmatprep.subr.mxu0 0.0
        %802 = vmatpush1.msra.mxu0 0.0
        %803 = vmatprep.subr.mxu0 0.0
        %804 = vmatpush1.msra.mxu0 0.0
        %805 = vmatprep.subr.mxu0 0.0
        %806 = vmatpush1.msra.mxu0 0.0
        %807 = vmatprep.subr.mxu0 0.0
        %808 = vmatpush1.msra.mxu0 0.0
        %809 = vmatprep.subr.mxu0 0.0
        %810 = vmatpush1.msra.mxu0 0.0
        %811 = vmatprep.subr.mxu0 0.0
        %812 = vmatpush1.msra.mxu0 0.0
        %813 = vmatprep.subr.mxu0 0.0
        %814 = vmatpush1.msra.mxu0 0.0
        %815 = vmatprep.subr.mxu0 0.0
        %816 = vmatpush1.msra.mxu0 0.0
        %817 = vmatprep.subr.mxu0 0.0
        %818 = vmatpush1.msra.mxu0 0.0
        %819 = vmatprep.subr.mxu0 0.0
        %820 = vmatpush1.msra.mxu0 0.0
        %821 = vmatprep.subr.mxu0 0.0
        %822 = vmatpush1.msra.mxu0 0.0
        %823 = vmatprep.mubr.f32.mxu0 0.0
        %824 = vmatmul.mubr.f32.gmra.mrb[0].mxu0 %v754
        %v825 = vpop.f32.mrb[0].mxu0
        %v826 = vadd.f32 %v750, %v825
        %v827 = vpop.f32.mrb[0].mxu0
        %828 = vmatprep.mubr.f32.mxu0 0.0
        %829 = vmatmul.mubr.f32.gmra.mrb[0].mxu0 %v757
        %v830 = vpop.f32.mrb[0].mxu0
        %v831 = vadd.f32 %v751, %v830
        %v832 = vpop.f32.mrb[0].mxu0
        %833 = vdwg.mxu0
        %v834 = vadd.f32 %v826, %v435
        %v835 = vadd.f32 %v831, %v436
        %vm836 = vcmp.ge.f32.partialorder %v834, 0.0
        %vm837 = vcmp.ge.f32.partialorder %v835, 0.0
        %v838 = vstv %s432
        %v839 = vmul.f32 %v838, %v834
        %v840 = vmul.f32 %v838, %v835
        %v841 = vsel %vm836, %v834, %v839
        %v842 = vsel %vm837, %v835, %v840
        %843 = vst [vmem:[%s429] sm:$0xff] %v841
        %844 = vst [vmem:[%s429 + $0x8] sm:$0xff] %v842
        %s845 = sand.u32 %s253, 1
        %s846 = scalar_lea.sflag [#allocation4], %s845
        %s847 = sand.u32 %s253, 1
        %s848 = smul.addr %s847, 16
        %s849 = scalar_lea.vmem [#allocation12], %s848
        // Predicated region
        $region81: #{tpu_custom_call.1} parent=59 // pred_check
          %p850 = pneg %p263
        $region82: #{tpu_custom_call.1} parent=59 // pred_check_branch
          %852 = sbr.rel (%p850) target = $region84
        $region83: #{tpu_custom_call.1} parent=59 // pred_region
          %s854 = ssub.s32 256, 256
          %855 = vsyncadd %s846, %s854
          %s856 = smul.addr %s30, 2
          %s857 = smul.addr %s856, 128
          %s858 = scalar_lea.hbm %s10, %s857
          %s859 = sshll.u32 %s849, 4
          %s860 = int_to_ptr.vmem [resolvable:$true] %s859
          %865 = dma.vmem_to_hbm [thread:$0]  %s860, 256, %s858, %s846, 128, 128, 8
        $region84: #{tpu_custom_call.1} parent=59 // pred_fallthru
          _
      $region60: #{tpu_custom_call.1} parent=5 // pred_fallthru
        _
      %p866 = scmp.le.s32.totalorder 2, %s25
      // Predicated region
      $region85: #{tpu_custom_call.1} parent=5 // pred_check
        %p867 = pneg %p866
      $region86: #{tpu_custom_call.1} parent=5 // pred_check_branch
        %869 = sbr.rel (%p867) target = $region88
      $region87: #{tpu_custom_call.1} parent=5 // pred_region
        %s870 = ssub.s32 %s25, 2
        // Predicated region
        $region89: #{tpu_custom_call.1} parent=87 // pred_check
          %p871 = pneg %p269
        $region90: #{tpu_custom_call.1} parent=87 // pred_check_branch
          %873 = sbr.rel (%p871) target = $region92
        $region91: #{tpu_custom_call.1} parent=87 // pred_region
          %s874 = sand.u32 %s254, 1
          %s875 = scalar_lea.sflag [#allocation4], %s874
          %s876 = sand.u32 %s254, 1
          %s877 = smul.addr %s876, 16
          %s878 = scalar_lea.vmem [#allocation12], %s877
          %879 = dma.done %s875, 256
        $region92: #{tpu_custom_call.1} parent=87 // pred_fallthru
          _
      $region88: #{tpu_custom_call.1} parent=5 // pred_fallthru
        _
    $region6: #{tpu_custom_call.1} parent=1 // loop_footer
      %s29 = sadd.s32 1, %s25
    $region7: #{tpu_custom_call.1} parent=1 // loop_footer_branch
      %24 = sbr.rel target = $region3
    $region8: #{tpu_custom_call.1} parent=1 // loop_exit
      _
    %880 = vsyncpa [#allocation3], 1
    %s881 = scalar_lea.sflag [#allocation3], 1
    %882 = vsyncpa %s881, 1
    %883 = vsyncpa [#allocation8], 1
    %884 = vsyncpa [#allocation11], 1
    %885 = vsyncpa [#allocation4], 1
    %s886 = scalar_lea.sflag [#allocation4], 1
    %887 = vsyncpa %s886, 1
    %888 = vsyncpa [#allocation5], 1
    %s889 = scalar_lea.sflag [#allocation5], 1
    %890 = vsyncpa %s889, 1

</llo_original>
